<compile_context>
chip_gen: v5e
topology: v5e:2x2
jax: 0.10.0
libtpu: 0.0.40
codegen_flags: <defaults>
</compile_context>

<pallas_src>
import functools

import jax
import jax.numpy as jnp
from jax import lax
from jax.experimental import pallas as pl
from jax.experimental.pallas import tpu as pltpu


# Contract the last dim of both operands: (B, E) x (C, E) -> (B, C).
_CONTRACT_LAST = (((1,), (1,)), ((), ()))


def _round_up(x, m):
    return (x + m - 1) // m * m


def _softmax_lastdim(x):
    m = jnp.max(x, axis=-1, keepdims=True)
    e = jnp.exp(x - m)
    return e / jnp.sum(e, axis=-1, keepdims=True)


def fused_kernel(we_ref, ce_ref, wc_ref, wdt_ref, bd_ref,
                 recon_ref, qsoft_ref, prior_ref, *, c_real):
    """Per S tile: recompute the tiny community math, emit one recon tile.

    Softmax(q) / prior are computed and written only on the first grid step.
    """
    we = we_ref[...]                             # (B, E)   f32, resident
    ce = ce_ref[...]                             # (B, E)   f32, resident
    wc = wc_ref[...]                             # (C_pad, E) f32, resident

    b = we.shape[0]
    c_pad = wc.shape[0]
    col = lax.broadcasted_iota(jnp.int32, (b, c_pad), 1)
    valid = col < c_real
    neg_inf = jnp.float32(-jnp.inf)

    # q = community_embeddings(w * c); padded lanes masked to -inf so argmax
    # / softmax never pick a padding column.
    q = lax.dot_general(we * ce, wc, _CONTRACT_LAST,
                        preferred_element_type=jnp.float32)     # (B, C_pad)
    q = jnp.where(valid, q, neg_inf)

    # Eval-path hard z: one-hot of argmax(q, -1) (lowest index on ties),
    # new_z = z @ W_comm (row select of W_comm).  ~B*C_pad*E MACs: free next
    # to the W_dec tile DMA, so recomputing per tile keeps new_z out of HBM.
    qmax = jnp.max(q, axis=-1, keepdims=True)
    amax = jnp.min(jnp.where(q == qmax, col, c_pad), axis=-1, keepdims=True)
    z = (col == amax).astype(jnp.float32)                       # (B, C_pad)
    new_z = jnp.dot(z, wc, preferred_element_type=jnp.float32)  # (B, E) f32

    # Decoder tile: recon = new_z @ W_dec^T + b, using the lane-dense (E, tS)
    # bf16 tile of W_dec (stored pre-transposed, so no in-kernel transpose).
    nz = new_z.astype(wdt_ref.dtype)                            # (B, E) bf16
    acc = jnp.dot(nz, wdt_ref[...],
                  preferred_element_type=jnp.float32)           # (B, tS) f32
    recon_ref[...] = acc + bd_ref[...]                          # +(1, tS) bias

    # One-shot outputs (blocks are grid-invariant; written once, flushed at
    # the end of the grid).
    @pl.when(pl.program_id(0) == 0)
    def _():
        p = lax.dot_general(we, wc, _CONTRACT_LAST,
                            preferred_element_type=jnp.float32)
        p = jnp.where(valid, p, neg_inf)
        qsoft_ref[...] = _softmax_lastdim(q)
        prior_ref[...] = _softmax_lastdim(p)


def prepare_params(params, *, decoder_dtype=jnp.bfloat16):
    """One-time weight prep (outside the jitted forward): pad W_comm to a
    lane-dense C_pad, transpose + pad + cast W_dec to (E, S_pad) bf16, pad the
    bias.  Returns (prepared_dict, C, S)."""
    node_emb = jnp.asarray(params["node_emb"], jnp.float32)     # (size, E)
    w_comm = jnp.asarray(params["w_comm"], jnp.float32)         # (C, E)
    w_dec = jnp.asarray(params["w_dec"])                        # (S, E)
    b_dec = jnp.asarray(params["b_dec"], jnp.float32)           # (S,)

    C, E = w_comm.shape
    S = w_dec.shape[0]
    C_pad = _round_up(C, 128)
    S_pad = _round_up(S, 128)

    wc_pad = jnp.zeros((C_pad, E), jnp.float32).at[:C, :].set(w_comm)
    wdt_pad = jnp.zeros((E, S_pad), decoder_dtype).at[:, :S].set(
        w_dec.astype(decoder_dtype).T)
    bd_pad = jnp.zeros((1, S_pad), jnp.float32).at[0, :S].set(b_dec)

    prep = {"node_emb": node_emb, "wc_pad": wc_pad,
            "wdt_pad": wdt_pad, "bd_pad": bd_pad}
    return prep, C, S


def _pick_tile(s_pad, tile_s):
    """Largest multiple of 128 that divides s_pad and is <= tile_s."""
    n_blk = s_pad // 128
    for nb in range(min(n_blk, max(tile_s // 128, 1)), 0, -1):
        if n_blk % nb == 0:
            return nb * 128
    return 128


@functools.partial(jax.jit, static_argnames=("c_real", "s_real", "tile_s"))
def gcn_gumbel_forward(w_idx, c_idx, node_emb, wc_pad, wdt_pad, bd_pad,
                       temp=1.0, *, c_real, s_real, tile_s=2048):
    """Eval-mode forward of GCNModelGumbel.  `temp` is unused on the eval path
    (matches the PyTorch module)."""
    del temp

    # Embedding gathers stay XLA glue.
    we = jnp.take(node_emb, w_idx, axis=0)                      # (B, E) f32
    ce = jnp.take(node_emb, c_idx, axis=0)                      # (B, E) f32

    B, E = we.shape
    C_pad = wc_pad.shape[0]
    S_pad = wdt_pad.shape[1]
    tS = _pick_tile(S_pad, int(tile_s))
    grid = (S_pad // tS,)

    # VMEM budget from the real footprint (double-buffered streamed tiles +
    # resident small operands/outputs), with headroom; capped for v7x.
    dec_itemsize = jnp.dtype(wdt_pad.dtype).itemsize
    streamed = 2 * (E * tS * dec_itemsize + tS * 4 + B * tS * 4)
    resident = 2 * B * E * 4 + C_pad * E * 4 + 2 * B * C_pad * 4
    vmem_limit = int(min(64 * 2**20, 2 * (streamed + resident) + 4 * 2**20))

    recon_pad, qsoft_pad, prior_pad = pl.pallas_call(
        functools.partial(fused_kernel, c_real=c_real),
        out_shape=(
            jax.ShapeDtypeStruct((B, S_pad), jnp.float32),
            jax.ShapeDtypeStruct((B, C_pad), jnp.float32),
            jax.ShapeDtypeStruct((B, C_pad), jnp.float32),
        ),
        grid_spec=pltpu.PrefetchScalarGridSpec(
            num_scalar_prefetch=0,
            grid=grid,
            in_specs=[
                pl.BlockSpec((B, E), lambda j: (0, 0)),        # we (resident)
                pl.BlockSpec((B, E), lambda j: (0, 0)),        # ce (resident)
                pl.BlockSpec((C_pad, E), lambda j: (0, 0)),    # W_comm pad
                pl.BlockSpec((E, tS), lambda j: (0, j)),       # W_dec^T tile
                pl.BlockSpec((1, tS), lambda j: (0, j)),       # bias tile
            ],
            out_specs=(
                pl.BlockSpec((B, tS), lambda j: (0, j)),       # recon tile
                pl.BlockSpec((B, C_pad), lambda j: (0, 0)),    # softmax(q)
                pl.BlockSpec((B, C_pad), lambda j: (0, 0)),    # prior
            ),
        ),
        compiler_params=pltpu.CompilerParams(
            dimension_semantics=("arbitrary",),
            vmem_limit_bytes=vmem_limit,
        ),
    )(we, ce, wc_pad, wdt_pad, bd_pad)

    return (recon_pad[:, :s_real],
            qsoft_pad[:, :c_real],
            prior_pad[:, :c_real])


def init_params(key, size, embedding_dim, categorical_dim):
    """Deterministic parameter init mimicking the module's __init__/init_emb:
       - nn.Embedding default: N(0, 1)
       - nn.Linear weights: xavier_uniform_, biases: 0."""
    k_node, k_comm, k_dec = jax.random.split(key, 3)

    def xavier_uniform(k, fan_out, fan_in):
        bound = (6.0 / (fan_in + fan_out)) ** 0.5
        return jax.random.uniform(k, (fan_out, fan_in), jnp.float32,
                                  minval=-bound, maxval=bound)

    return {
        "node_emb": jax.random.normal(k_node, (size, embedding_dim),
                                      jnp.float32),
        "w_comm": xavier_uniform(k_comm, categorical_dim, embedding_dim),
        "w_dec": xavier_uniform(k_dec, size, embedding_dim),
        "b_dec": jnp.zeros((size,), jnp.float32),
    }


if __name__ == "__main__":
    size = 64            # number of nodes
    embedding_dim = 32
    categorical_dim = 8
    batch = 8

    key = jax.random.PRNGKey(0)
    k_params, k_w, k_c = jax.random.split(key, 3)
    params = init_params(k_params, size, embedding_dim, categorical_dim)
    prep, C, S = prepare_params(params)          # one-time pad/cast/transpose

    w_idx = jax.random.randint(k_w, (batch,), 0, size, dtype=jnp.int32)
    c_idx = jax.random.randint(k_c, (batch,), 0, size, dtype=jnp.int32)

    recon, q_soft, prior = gcn_gumbel_forward(
        w_idx, c_idx, prep["node_emb"], prep["wc_pad"],
        prep["wdt_pad"], prep["bd_pad"], c_real=C, s_real=S)
    jax.block_until_ready((recon, q_soft, prior))

    # -------- Pure-JAX f32 reference (VPU-exact einsums) --------
    hi = jax.lax.Precision.HIGHEST
    we = jnp.take(params["node_emb"], w_idx, axis=0)
    ce = jnp.take(params["node_emb"], c_idx, axis=0)
    q_ref = jnp.einsum("be,ce->bc", we * ce, params["w_comm"], precision=hi)
    prior_ref = jax.nn.softmax(
        jnp.einsum("be,ce->bc", we, params["w_comm"], precision=hi), axis=-1)
    # Build recon reference from the kernel's argmax decision (avoids flaky
    # tie-breaking mismatches); validates the one-hot select + decoder path.
    z_idx = jnp.argmax(q_soft, axis=-1)
    new_z_ref = params["w_comm"][z_idx]
    recon_ref = jnp.einsum("be,se->bs", new_z_ref, params["w_dec"],
                           precision=hi) + params["b_dec"]

    assert recon.shape == (batch, size)
    assert q_soft.shape == (batch, categorical_dim)
    assert prior.shape == (batch, categorical_dim)
    assert bool(jnp.all(jnp.isfinite(recon)))
    assert bool(jnp.allclose(jnp.sum(q_soft, axis=-1), 1.0, atol=1e-4))
    assert bool(jnp.allclose(jnp.sum(prior, axis=-1), 1.0, atol=1e-4))
    assert bool(jnp.allclose(q_soft, jax.nn.softmax(q_ref, -1), atol=2e-2))
    assert bool(jnp.allclose(prior, prior_ref, atol=2e-2))
    # bf16 W_dec streaming: tolerance covers the deliberate precision tradeoff.
    assert bool(jnp.allclose(recon, recon_ref, atol=5e-2, rtol=5e-2))
    print("KERNEL_OK")
</pallas_src>

<mosaic_0001>
module attributes {stable_mosaic.version = 11 : i64} {
  func.func @fused_kernel(%arg0: i32, %arg1: memref<8x32xf32, #tpu.memory_space<vmem>>, %arg2: memref<8x32xf32, #tpu.memory_space<vmem>>, %arg3: memref<128x32xf32, #tpu.memory_space<vmem>>, %arg4: memref<32x128xbf16, #tpu.memory_space<vmem>>, %arg5: memref<1x128xf32, #tpu.memory_space<vmem>>, %arg6: memref<8x128xf32, #tpu.memory_space<vmem>>, %arg7: memref<8x128xf32, #tpu.memory_space<vmem>>, %arg8: memref<8x128xf32, #tpu.memory_space<vmem>>) attributes {dimension_semantics = [#tpu.dimension_semantics<arbitrary>], iteration_bounds = array<i64: 1>, scalar_prefetch = 0 : i64, scratch_operands = 0 : i64, tpu.core_type = #tpu.core_type<tc>, window_params = [{pipeline_mode = #tpu.pipeline_mode<synchronous>, transform_indices = @transform_0, window_bounds = array<i64: 8, 32>}, {pipeline_mode = #tpu.pipeline_mode<synchronous>, transform_indices = @transform_1, window_bounds = array<i64: 8, 32>}, {pipeline_mode = #tpu.pipeline_mode<synchronous>, transform_indices = @transform_2, window_bounds = array<i64: 128, 32>}, {transform_indices = @transform_3, window_bounds = array<i64: 32, 128>}, {transform_indices = @transform_4, window_bounds = array<i64: 1, 128>}, {transform_indices = @transform_5, window_bounds = array<i64: 8, 128>}, {pipeline_mode = #tpu.pipeline_mode<synchronous>, transform_indices = @transform_6, window_bounds = array<i64: 8, 128>}, {pipeline_mode = #tpu.pipeline_mode<synchronous>, transform_indices = @transform_7, window_bounds = array<i64: 8, 128>}]} {
    %c0 = arith.constant 0 : index
    %c0_0 = arith.constant 0 : index
    %0 = vector.load %arg1[%c0, %c0_0] : memref<8x32xf32, #tpu.memory_space<vmem>>, vector<8x32xf32>
    %c0_1 = arith.constant 0 : index
    %c0_2 = arith.constant 0 : index
    %1 = vector.load %arg2[%c0_1, %c0_2] : memref<8x32xf32, #tpu.memory_space<vmem>>, vector<8x32xf32>
    %c0_3 = arith.constant 0 : index
    %c0_4 = arith.constant 0 : index
    %2 = vector.load %arg3[%c0_3, %c0_4] : memref<128x32xf32, #tpu.memory_space<vmem>>, vector<128x32xf32>
    %3 = tpu.iota {dimensions = array<i32: 1>} : vector<8x128xi32>
    %c8_i32 = arith.constant 8 : i32
    %4 = vector.broadcast %c8_i32 : i32 to vector<8x128xi32>
    %5 = arith.cmpi slt, %3, %4 : vector<8x128xi32>
    %6 = arith.mulf %0, %1 : vector<8x32xf32>
    %cst = arith.constant dense<0.000000e+00> : vector<8x128xf32>
    %7 = tpu.matmul %6, %2, %cst {dimension_numbers = #tpu.dot_dimension_numbers<[1], [1], [0], [0], [0, 0, 1, 0], [], []>} : vector<8x32xf32>, vector<128x32xf32>, vector<8x128xf32> -> vector<8x128xf32>
    %cst_5 = arith.constant 0xFF800000 : f32
    %8 = vector.broadcast %cst_5 : f32 to vector<8x128xf32>
    %9 = arith.select %5, %7, %8 : vector<8x128xi1>, vector<8x128xf32>
    %cst_6 = arith.constant dense<0xFF800000> : vector<8xf32>
    %10 = vector.multi_reduction <maximumf>, %9, %cst_6 [1] : vector<8x128xf32> to vector<8xf32>
    %11 = vector.shape_cast %10 : vector<8xf32> to vector<8x1xf32>
    %12 = vector.broadcast %11 : vector<8x1xf32> to vector<8x128xf32>
    %13 = arith.cmpf oeq, %9, %12 : vector<8x128xf32>
    %c128_i32 = arith.constant 128 : i32
    %14 = vector.broadcast %c128_i32 : i32 to vector<8x128xi32>
    %15 = arith.select %13, %3, %14 : vector<8x128xi1>, vector<8x128xi32>
    %cst_7 = arith.constant dense<2147483647> : vector<8xi32>
    %16 = vector.multi_reduction <minsi>, %15, %cst_7 [1] : vector<8x128xi32> to vector<8xi32>
    %17 = vector.shape_cast %16 : vector<8xi32> to vector<8x1xi32>
    %18 = vector.broadcast %17 : vector<8x1xi32> to vector<8x128xi32>
    %19 = arith.cmpi eq, %3, %18 : vector<8x128xi32>
    %20 = arith.extui %19 : vector<8x128xi1> to vector<8x128xi32>
    %21 = arith.sitofp %20 : vector<8x128xi32> to vector<8x128xf32>
    %cst_8 = arith.constant dense<0.000000e+00> : vector<8x32xf32>
    %22 = tpu.matmul %21, %2, %cst_8 {dimension_numbers = #tpu.dot_dimension_numbers<[1], [0], [0], [1], [0, 0, 1, 1], [], []>} : vector<8x128xf32>, vector<128x32xf32>, vector<8x32xf32> -> vector<8x32xf32>
    %23 = arith.truncf %22 : vector<8x32xf32> to vector<8x32xbf16>
    %c0_9 = arith.constant 0 : index
    %c0_10 = arith.constant 0 : index
    %24 = vector.load %arg4[%c0_9, %c0_10] : memref<32x128xbf16, #tpu.memory_space<vmem>>, vector<32x128xbf16>
    %cst_11 = arith.constant dense<0.000000e+00> : vector<8x128xf32>
    %25 = tpu.matmul %23, %24, %cst_11 {dimension_numbers = #tpu.dot_dimension_numbers<[1], [0], [0], [1], [0, 0, 1, 1], [], []>} : vector<8x32xbf16>, vector<32x128xbf16>, vector<8x128xf32> -> vector<8x128xf32>
    %c0_12 = arith.constant 0 : index
    %c0_13 = arith.constant 0 : index
    %26 = vector.load %arg5[%c0_12, %c0_13] : memref<1x128xf32, #tpu.memory_space<vmem>>, vector<1x128xf32>
    %27 = vector.broadcast %26 : vector<1x128xf32> to vector<8x128xf32>
    %28 = arith.addf %25, %27 : vector<8x128xf32>
    %c0_14 = arith.constant 0 : index
    %c0_15 = arith.constant 0 : index
    %29 = vector.load %arg6[%c0_14, %c0_15] : memref<8x128xf32, #tpu.memory_space<vmem>>, vector<8x128xf32>
    tpu.vector_store %arg6[%c0_14, %c0_15], %28 {strides = array<i32>} : memref<8x128xf32, #tpu.memory_space<vmem>>, vector<8x128xf32>,
    %c0_i32 = arith.constant 0 : i32
    %30 = arith.cmpi eq, %arg0, %c0_i32 : i32
    %31 = arith.extui %30 : i1 to i32
    %cst_16 = arith.constant 0xFF800000 : f32
    %c0_i32_17 = arith.constant 0 : i32
    %32 = arith.cmpi ne, %31, %c0_i32_17 : i32
    scf.if %32 {
      %cst_18 = arith.constant dense<0.000000e+00> : vector<8x128xf32>
      %33 = tpu.matmul %0, %2, %cst_18 {dimension_numbers = #tpu.dot_dimension_numbers<[1], [1], [0], [0], [0, 0, 1, 0], [], []>} : vector<8x32xf32>, vector<128x32xf32>, vector<8x128xf32> -> vector<8x128xf32>
      %34 = vector.broadcast %cst_16 : f32 to vector<8x128xf32>
      %35 = arith.select %5, %33, %34 : vector<8x128xi1>, vector<8x128xf32>
      %cst_19 = arith.constant dense<0xFF800000> : vector<8xf32>
      %36 = vector.multi_reduction <maximumf>, %9, %cst_19 [1] : vector<8x128xf32> to vector<8xf32>
      %37 = vector.shape_cast %36 : vector<8xf32> to vector<8x1xf32>
      %38 = vector.broadcast %37 : vector<8x1xf32> to vector<8x128xf32>
      %39 = arith.subf %9, %38 : vector<8x128xf32>
      %40 = math.exp %39 : vector<8x128xf32>
      %cst_20 = arith.constant dense<0.000000e+00> : vector<8xf32>
      %41 = vector.multi_reduction <add>, %40, %cst_20 [1] : vector<8x128xf32> to vector<8xf32>
      %42 = vector.shape_cast %41 : vector<8xf32> to vector<8x1xf32>
      %43 = vector.broadcast %42 : vector<8x1xf32> to vector<8x128xf32>
      %44 = arith.divf %40, %43 : vector<8x128xf32>
      %c0_21 = arith.constant 0 : index
      %c0_22 = arith.constant 0 : index
      %45 = vector.load %arg7[%c0_21, %c0_22] : memref<8x128xf32, #tpu.memory_space<vmem>>, vector<8x128xf32>
      tpu.vector_store %arg7[%c0_21, %c0_22], %44 {strides = array<i32>} : memref<8x128xf32, #tpu.memory_space<vmem>>, vector<8x128xf32>,
      %cst_23 = arith.constant dense<0xFF800000> : vector<8xf32>
      %46 = vector.multi_reduction <maximumf>, %35, %cst_23 [1] : vector<8x128xf32> to vector<8xf32>
      %47 = vector.shape_cast %46 : vector<8xf32> to vector<8x1xf32>
      %48 = vector.broadcast %47 : vector<8x1xf32> to vector<8x128xf32>
      %49 = arith.subf %35, %48 : vector<8x128xf32>
      %50 = math.exp %49 : vector<8x128xf32>
      %cst_24 = arith.constant dense<0.000000e+00> : vector<8xf32>
      %51 = vector.multi_reduction <add>, %50, %cst_24 [1] : vector<8x128xf32> to vector<8xf32>
      %52 = vector.shape_cast %51 : vector<8xf32> to vector<8x1xf32>
      %53 = vector.broadcast %52 : vector<8x1xf32> to vector<8x128xf32>
      %54 = arith.divf %50, %53 : vector<8x128xf32>
      %c0_25 = arith.constant 0 : index
      %c0_26 = arith.constant 0 : index
      %55 = vector.load %arg8[%c0_25, %c0_26] : memref<8x128xf32, #tpu.memory_space<vmem>>, vector<8x128xf32>
      tpu.vector_store %arg8[%c0_25, %c0_26], %54 {strides = array<i32>} : memref<8x128xf32, #tpu.memory_space<vmem>>, vector<8x128xf32>,
    } else {
    }
    return
  }
  func.func @transform_0(%arg0: i32) -> (i32, i32) {
    %c0_i32 = arith.constant 0 : i32
    %c0_i32_0 = arith.constant 0 : i32
    %c0_i32_1 = arith.constant 0 : i32
    return %c0_i32, %c0_i32_0 : i32, i32
  }
  func.func @transform_1(%arg0: i32) -> (i32, i32) {
    %c0_i32 = arith.constant 0 : i32
    %c0_i32_0 = arith.constant 0 : i32
    %c0_i32_1 = arith.constant 0 : i32
    return %c0_i32, %c0_i32_0 : i32, i32
  }
  func.func @transform_2(%arg0: i32) -> (i32, i32) {
    %c0_i32 = arith.constant 0 : i32
    %c0_i32_0 = arith.constant 0 : i32
    %c0_i32_1 = arith.constant 0 : i32
    return %c0_i32, %c0_i32_0 : i32, i32
  }
  func.func @transform_3(%arg0: i32) -> (i32, i32) {
    %c0_i32 = arith.constant 0 : i32
    %c0_i32_0 = arith.constant 0 : i32
    return %c0_i32, %arg0 : i32, i32
  }
  func.func @transform_4(%arg0: i32) -> (i32, i32) {
    %c0_i32 = arith.constant 0 : i32
    %c0_i32_0 = arith.constant 0 : i32
    return %c0_i32, %arg0 : i32, i32
  }
  func.func @transform_5(%arg0: i32) -> (i32, i32) {
    %c0_i32 = arith.constant 0 : i32
    %c0_i32_0 = arith.constant 0 : i32
    return %c0_i32, %arg0 : i32, i32
  }
  func.func @transform_6(%arg0: i32) -> (i32, i32) {
    %c0_i32 = arith.constant 0 : i32
    %c0_i32_0 = arith.constant 0 : i32
    %c0_i32_1 = arith.constant 0 : i32
    return %c0_i32, %c0_i32_0 : i32, i32
  }
  func.func @transform_7(%arg0: i32) -> (i32, i32) {
    %c0_i32 = arith.constant 0 : i32
    %c0_i32_0 = arith.constant 0 : i32
    %c0_i32_1 = arith.constant 0 : i32
    return %c0_i32, %c0_i32_0 : i32, i32
  }
}

</mosaic_0001>

<llo_original>
// kernel: gcn_gumbel_forward.1
$region0: #{gcn_gumbel_forward.1}
  #allocation0 [shape = 'u32[]', space=smem, size = 0x4, offset = 0x4, fixed_abs, tag = 'smem constant byte address 0x4 - core index']
  #allocation1 [shape = 'u32[72,128]{1,0:T(1,128)}', space=vmem, size = 0x9000, scoped, tag = 'internal scratch']
  %s0 = inlined_call_operand.vmem [shape: f32[8,32], index: 0, kind: input, shape index: {}]
  %s1 = inlined_call_operand.vmem [shape: f32[8,32], index: 1, kind: input, shape index: {}]
  %s2 = inlined_call_operand.vmem [shape: f32[128,32], index: 2, kind: input, shape index: {}]
  %s3 = inlined_call_operand.vmem [shape: bf16[32,128], index: 3, kind: input, shape index: {}]
  %s4 = inlined_call_operand.vmem [shape: f32[1,128], index: 4, kind: input, shape index: {}]
  %s5 = inlined_call_operand.hbm [shape: f32[8,128], index: 5, kind: output, shape index: {0}]
  %s6 = inlined_call_operand.hbm [shape: f32[8,128], index: 6, kind: output, shape index: {1}]
  %s7 = inlined_call_operand.hbm [shape: f32[8,128], index: 7, kind: output, shape index: {2}]
  %8 = xla_tuple %s5, %s6, %s7
  %s9 = sld [smem:[#allocation0]]
  $region50: #{gcn_gumbel_forward.1} parent=0
    _
  %s11 = ssub.s32 1, %s9
  %s12 = scalar_select 0, %s11, %s9
  $region1: #{gcn_gumbel_forward.1} parent=0
    #allocation2 [shape = 'u8[4096]{0}', space=vmem, size = 0x1000, scoped, tag = 'output window, operand 0, single buffered']
    #allocation3 [shape = 's32[1]{0}', space=sflag, size = 0x4, scoped, tag = 'scoped memory for gcn_gumbel_forward.1']
    #allocation4 [shape = 'u8[4096]{0}', space=vmem, size = 0x1000, scoped, tag = 'output window, operand 1, single buffered']
    #allocation5 [shape = 's32[1]{0}', space=sflag, size = 0x4, scoped, tag = 'scoped memory for gcn_gumbel_forward.1']
    #allocation6 [shape = 'u8[4096]{0}', space=vmem, size = 0x1000, scoped, tag = 'output window, operand 2, single buffered']
    %13 = vsyncpa [#allocation3], 0
    %14 = vsyncpa [#allocation5], 0
    // Predicated region
    $region2: #{gcn_gumbel_forward.1} parent=1 // pred_check
      _
    $region3: #{gcn_gumbel_forward.1} parent=1 // pred_check_branch
      %16 = sbr.rel (0) target = $region5
    $region4: #{gcn_gumbel_forward.1} parent=1 // pred_region
      _
    $region5: #{gcn_gumbel_forward.1} parent=1 // pred_fallthru
      _
    // Predicated region
    $region6: #{gcn_gumbel_forward.1} parent=1 // pred_check
      _
    $region7: #{gcn_gumbel_forward.1} parent=1 // pred_check_branch
      %18 = sbr.rel (0) target = $region9
    $region8: #{gcn_gumbel_forward.1} parent=1 // pred_region
      _
    $region9: #{gcn_gumbel_forward.1} parent=1 // pred_fallthru
      _
    // Predicated region
    $region10: #{gcn_gumbel_forward.1} parent=1 // pred_check
      _
    $region11: #{gcn_gumbel_forward.1} parent=1 // pred_check_branch
      %20 = sbr.rel (0) target = $region13
    $region12: #{gcn_gumbel_forward.1} parent=1 // pred_region
      _
    $region13: #{gcn_gumbel_forward.1} parent=1 // pred_fallthru
      _
    // Predicated region
    $region14: #{gcn_gumbel_forward.1} parent=1 // pred_check
      _
    $region15: #{gcn_gumbel_forward.1} parent=1 // pred_check_branch
      %22 = sbr.rel (0) target = $region17
    $region16: #{gcn_gumbel_forward.1} parent=1 // pred_region
      _
    $region17: #{gcn_gumbel_forward.1} parent=1 // pred_fallthru
      _
    // Predicated region
    $region18: #{gcn_gumbel_forward.1} parent=1 // pred_check
      _
    $region19: #{gcn_gumbel_forward.1} parent=1 // pred_check_branch
      %24 = sbr.rel (0) target = $region21
    $region20: #{gcn_gumbel_forward.1} parent=1 // pred_region
      _
    $region21: #{gcn_gumbel_forward.1} parent=1 // pred_fallthru
      _
    %v26 = vld [vmem:[%s0] sm:$0xff]
    %v27 = vld [vmem:[%s1] sm:$0xff]
    %v28 = vld [vmem:[%s2] sm:$0xff]
    %v29 = vld [vmem:[%s2 + $0x8] sm:$0xff]
    %v30 = vld [vmem:[%s2 + $0x10] sm:$0xff]
    %v31 = vld [vmem:[%s2 + $0x18] sm:$0xff]
    %v32 = vld [vmem:[%s2 + $0x20] sm:$0xff]
    %v33 = vld [vmem:[%s2 + $0x28] sm:$0xff]
    %v34 = vld [vmem:[%s2 + $0x30] sm:$0xff]
    %v35 = vld [vmem:[%s2 + $0x38] sm:$0xff]
    %v36 = vld [vmem:[%s2 + $0x40] sm:$0xff]
    %v37 = vld [vmem:[%s2 + $0x48] sm:$0xff]
    %v38 = vld [vmem:[%s2 + $0x50] sm:$0xff]
    %v39 = vld [vmem:[%s2 + $0x58] sm:$0xff]
    %v40 = vld [vmem:[%s2 + $0x60] sm:$0xff]
    %v41 = vld [vmem:[%s2 + $0x68] sm:$0xff]
    %v42 = vld [vmem:[%s2 + $0x70] sm:$0xff]
    %v43 = vld [vmem:[%s2 + $0x78] sm:$0xff]
    %v44 = vlaneseq
    %v45 = vand.u32 %v44, 127
    %vm46 = vcmp.lt.s32.totalorder %v45, 8
    %v47 = vmul.f32 %v26, %v27
    %vm48 = vcmask 261120
    %v50 = vsel %vm48, %v47, 0
    %v53 = vsel %vm48, %v28, 0
    %v56 = vsel %vm48, %v29, 0
    %v59 = vsel %vm48, %v30, 0
    %v62 = vsel %vm48, %v31, 0
    %v65 = vsel %vm48, %v32, 0
    %v68 = vsel %vm48, %v33, 0
    %v71 = vsel %vm48, %v34, 0
    %v74 = vsel %vm48, %v35, 0
    %v77 = vsel %vm48, %v36, 0
    %v80 = vsel %vm48, %v37, 0
    %v83 = vsel %vm48, %v38, 0
    %v86 = vsel %vm48, %v39, 0
    %v89 = vsel %vm48, %v40, 0
    %v92 = vsel %vm48, %v41, 0
    %v95 = vsel %vm48, %v42, 0
    %v98 = vsel %vm48, %v43, 0
    %100 = vmatpush.xpose.msra.mxu0 %v98
    %101 = vmatpush.xpose.msra.mxu0 %v95
    %102 = vmatpush.xpose.msra.mxu0 %v92
    %103 = vmatpush.xpose.msra.mxu0 %v89
    %104 = vmatpush.xpose.msra.mxu0 %v86
    %105 = vmatpush.xpose.msra.mxu0 %v83
    %106 = vmatpush.xpose.msra.mxu0 %v80
    %107 = vmatpush.xpose.msra.mxu0 %v77
    %108 = vmatpush.xpose.msra.mxu0 %v74
    %109 = vmatpush.xpose.msra.mxu0 %v71
    %110 = vmatpush.xpose.msra.mxu0 %v68
    %111 = vmatpush.xpose.msra.mxu0 %v65
    %112 = vmatpush.xpose.msra.mxu0 %v62
    %113 = vmatpush.xpose.msra.mxu0 %v59
    %114 = vmatpush.xpose.msra.mxu0 %v56
    %115 = vmatpush.xpose.msra.mxu0 %v53
    %116 = vmatmul.f32.gmra.mxu0 %v50
    %v117 = vpop.f32.mrf.mxu0
    %v118 = vadd.f32 0.0, %v117
    %119 = vdwg.mxu0
    %v120 = vsel %vm46, %v118, -inf
    %121 = vmax.xlane.f32.xlu0 %v120
    %v122 = vpop.xlane.xlu0 %121
    %vm123 = vcmp.eq.f32.partialorder %v120, %v122
    %v124 = vsel %vm123, %v45, 128
    %v125 = vand.u32 %v124, 65535
    %v126 = vshra.s32 %v124, 16
    %v127 = vcvt.s32.f32 %v125
    %v128 = vcvt.s32.f32 %v126
    %129 = vmin.xlane.f32.xlu0 %v128
    %v130 = vpop.xlane.xlu0 %129
    %vm131 = vcmp.eq.f32.partialorder %v128, %v130
    %v132 = vsel %vm131, %v127, inf
    %133 = vmin.xlane.f32.xlu0 %v132
    %v134 = vpop.xlane.xlu0 %133
    %v135 = vcvt.f32.s32 %v134
    %v136 = vcvt.f32.s32 %v130
    %v137 = vshll.u32 %v136, 16
    %v138 = vadd.s32 %v137, %v135
    %vm139 = vcmp.eq.s32.totalorder %v45, %v138
    %v140 = vsel %vm139, 1, 0
    %v141 = vcvt.s32.f32 %v140
    %142 = vmatpush.msra.mxu0 %v43
    %143 = vmatpush.msra.mxu0 %v42
    %144 = vmatpush.msra.mxu0 %v41
    %145 = vmatpush.msra.mxu0 %v40
    %146 = vmatpush.msra.mxu0 %v39
    %147 = vmatpush.msra.mxu0 %v38
    %148 = vmatpush.msra.mxu0 %v37
    %149 = vmatpush.msra.mxu0 %v36
    %150 = vmatpush.msra.mxu0 %v35
    %151 = vmatpush.msra.mxu0 %v34
    %152 = vmatpush.msra.mxu0 %v33
    %153 = vmatpush.msra.mxu0 %v32
    %154 = vmatpush.msra.mxu0 %v31
    %155 = vmatpush.msra.mxu0 %v30
    %156 = vmatpush.msra.mxu0 %v29
    %157 = vmatpush.msra.mxu0 %v28
    %158 = vmatmul.f32.gmra.mxu0 %v141
    %v159 = vpop.f32.mrf.mxu0
    %v160 = vadd.f32 0.0, %v159
    %161 = vdwg.mxu0
    %v162 = vpack.c.bf16 %v160, %v160
    %v163 = vld [vmem:[%s3] sm:$0xf]
    %v164 = vld [vmem:[%s3 + $0x4] sm:$0xf]
    %v165 = vld [vmem:[%s3 + $0x8] sm:$0xf]
    %v166 = vld [vmem:[%s3 + $0xc] sm:$0xf]
    %v167 = vld [vmem:[%s4] sm:$0x1]
    %v169 = vperm.slane %v167, 0
    %v175 = vunpack.c.l.b16 %v163
    %v176 = vunpack.c.l.b16 %v164
    %v177 = vunpack.c.l.b16 %v165
    %v178 = vunpack.c.l.b16 %v166
    %v179 = vpack.c.b16 %v176, %v175
    %v180 = vpack.c.b16 %v178, %v177
    %v184 = vsel %vm48, %v162, 0
    %186 = vmatpush.bf16.msra.mxu0 0
    %187 = vmatpush.bf16.msra.mxu0 0
    %188 = vmatpush.bf16.msra.mxu0 0
    %189 = vmatpush.bf16.msra.mxu0 0
    %190 = vmatpush.bf16.msra.mxu0 0
    %191 = vmatpush.bf16.msra.mxu0 0
    %192 = vmatpush.bf16.msra.mxu0 %v180
    %193 = vmatpush.bf16.msra.mxu0 %v179
    %194 = vmatmul.bf16.gmra.mxu0 %v184
    %v195 = vpop.f32.mrf.mxu0
    %v196 = vadd.f32 %v169, %v195
    %v197 = vpop.f32.mrf.mxu0
    %198 = vdwg.mxu0
    %199 = vst [vmem:[#allocation2] sm:$0xff] %v196
    %p200 = scmp.eq.s32.totalorder 0, 0
    // Predicated region
    $region22: #{gcn_gumbel_forward.1} parent=1 // pred_check
      %p201 = pneg %p200
    $region23: #{gcn_gumbel_forward.1} parent=1 // pred_check_branch
      %203 = sbr.rel (%p201) target = $region25
    $region24: #{gcn_gumbel_forward.1} parent=1 // pred_region
      %v205 = vsel %vm48, %v26, 0
      %207 = vmatpush.xpose.msra.mxu0 %v98
      %208 = vmatpush.xpose.msra.mxu0 %v95
      %209 = vmatpush.xpose.msra.mxu0 %v92
      %210 = vmatpush.xpose.msra.mxu0 %v89
      %211 = vmatpush.xpose.msra.mxu0 %v86
      %212 = vmatpush.xpose.msra.mxu0 %v83
      %213 = vmatpush.xpose.msra.mxu0 %v80
      %214 = vmatpush.xpose.msra.mxu0 %v77
      %215 = vmatpush.xpose.msra.mxu0 %v74
      %216 = vmatpush.xpose.msra.mxu0 %v71
      %217 = vmatpush.xpose.msra.mxu0 %v68
      %218 = vmatpush.xpose.msra.mxu0 %v65
      %219 = vmatpush.xpose.msra.mxu0 %v62
      %220 = vmatpush.xpose.msra.mxu0 %v59
      %221 = vmatpush.xpose.msra.mxu0 %v56
      %222 = vmatpush.xpose.msra.mxu0 %v53
      %223 = vmatmul.f32.gmra.mxu0 %v205
      %v224 = vpop.f32.mrf.mxu0
      %v225 = vadd.f32 0.0, %v224
      %226 = vdwg.mxu0
      %v227 = vsel %vm46, %v225, -inf
      %v228 = vsub.f32 %v120, %v122
      %v229 = vmul.f32 %v228, 1.442695
      %v230 = vpow.pop %v229
      %231 = vadd.xlane.f32.xlu0 %v230
      %v232 = vpop.xlane.xlu0 %231
      %v233 = vrcp.pop %v232
      %v234 = vmul.f32 %v232, %v233
      %v235 = vsub.f32 1.0, %v234
      %v236 = vmul.f32 %v233, %v235
      %v237 = vadd.f32 %v233, %v236
      %vm238 = vweird.f32 %v232
      %vm239 = vweird.f32 %v233
      %vm240 = vmor %vm238, %vm239
      %v241 = vsel %vm240, %v233, %v237
      %v242 = vand.u32 2147483647, %v232
      %vm243 = vcmp.eq.f32.partialorder %v242, 8.507059e+37
      %v244 = vand.u32 %v232, 2147483648
      %v245 = vor.u32 1.1754944e-38, %v244
      %v246 = vsel %vm243, %v245, %v241
      %v247 = vmul.f32 %v230, %v246
      %248 = vst [vmem:[#allocation4] sm:$0xff] %v247
      %249 = vmax.xlane.f32.xlu0 %v227
      %v250 = vpop.xlane.xlu0 %249
      %v251 = vsub.f32 %v227, %v250
      %v252 = vmul.f32 %v251, 1.442695
      %v253 = vpow.pop %v252
      %254 = vadd.xlane.f32.xlu0 %v253
      %v255 = vpop.xlane.xlu0 %254
      %v256 = vrcp.pop %v255
      %v257 = vmul.f32 %v255, %v256
      %v258 = vsub.f32 1.0, %v257
      %v259 = vmul.f32 %v256, %v258
      %v260 = vadd.f32 %v256, %v259
      %vm261 = vweird.f32 %v255
      %vm262 = vweird.f32 %v256
      %vm263 = vmor %vm261, %vm262
      %v264 = vsel %vm263, %v256, %v260
      %v265 = vand.u32 2147483647, %v255
      %vm266 = vcmp.eq.f32.partialorder %v265, 8.507059e+37
      %v267 = vand.u32 %v255, 2147483648
      %v268 = vor.u32 1.1754944e-38, %v267
      %v269 = vsel %vm266, %v268, %v264
      %v270 = vmul.f32 %v253, %v269
      %271 = vst [vmem:[#allocation6] sm:$0xff] %v270
    $region25: #{gcn_gumbel_forward.1} parent=1 // pred_fallthru
      _
    // Predicated region
    $region26: #{gcn_gumbel_forward.1} parent=1 // pred_check
      _
    $region27: #{gcn_gumbel_forward.1} parent=1 // pred_check_branch
      %273 = sbr.rel (0) target = $region29
    $region28: #{gcn_gumbel_forward.1} parent=1 // pred_region
      %275 = vsyncadd [#allocation3], 0
      %s277 = sshll.u32 [#allocation2], 4
      %s278 = int_to_ptr.vmem [resolvable:$true] %s277
      %s279 = sshll.u32 %s5, 4
      %s280 = int_to_ptr.hbm [resolvable:$true] %s279
      %282 = dma.vmem_to_hbm [thread:$0]  %s278, 128, %s280, [#allocation3]
    $region29: #{gcn_gumbel_forward.1} parent=1 // pred_fallthru
      _
    // Predicated region
    $region30: #{gcn_gumbel_forward.1} parent=1 // pred_check
      _
    $region31: #{gcn_gumbel_forward.1} parent=1 // pred_check_branch
      %284 = sbr.rel (0) target = $region33
    $region32: #{gcn_gumbel_forward.1} parent=1 // pred_region
      %286 = vsyncadd [#allocation5], 0
      %s288 = sshll.u32 [#allocation4], 4
      %s289 = int_to_ptr.vmem [resolvable:$true] %s288
      %s290 = sshll.u32 %s6, 4
      %s291 = int_to_ptr.hbm [resolvable:$true] %s290
      %293 = dma.vmem_to_hbm [thread:$0]  %s289, 128, %s291, [#allocation5]
    $region33: #{gcn_gumbel_forward.1} parent=1 // pred_fallthru
      _
    // Predicated region
    $region34: #{gcn_gumbel_forward.1} parent=1 // pred_check
      _
    $region35: #{gcn_gumbel_forward.1} parent=1 // pred_check_branch
      %295 = sbr.rel (0) target = $region37
    $region36: #{gcn_gumbel_forward.1} parent=1 // pred_region
      %297 = vsyncadd [#allocation5], 0
      %s299 = sshll.u32 [#allocation6], 4
      %s300 = int_to_ptr.vmem [resolvable:$true] %s299
      %s301 = sshll.u32 %s7, 4
      %s302 = int_to_ptr.hbm [resolvable:$true] %s301
      %304 = dma.vmem_to_hbm [thread:$0]  %s300, 128, %s302, [#allocation5]
    $region37: #{gcn_gumbel_forward.1} parent=1 // pred_fallthru
      _
    // Predicated region
    $region38: #{gcn_gumbel_forward.1} parent=1 // pred_check
      _
    $region39: #{gcn_gumbel_forward.1} parent=1 // pred_check_branch
      %306 = sbr.rel (0) target = $region41
    $region40: #{gcn_gumbel_forward.1} parent=1 // pred_region
      %308 = dma.done [#allocation3], 128
    $region41: #{gcn_gumbel_forward.1} parent=1 // pred_fallthru
      _
    // Predicated region
    $region42: #{gcn_gumbel_forward.1} parent=1 // pred_check
      _
    $region43: #{gcn_gumbel_forward.1} parent=1 // pred_check_branch
      %310 = sbr.rel (0) target = $region45
    $region44: #{gcn_gumbel_forward.1} parent=1 // pred_region
      %312 = dma.done [#allocation5], 128
    $region45: #{gcn_gumbel_forward.1} parent=1 // pred_fallthru
      _
    // Predicated region
    $region46: #{gcn_gumbel_forward.1} parent=1 // pred_check
      _
    $region47: #{gcn_gumbel_forward.1} parent=1 // pred_check_branch
      %314 = sbr.rel (0) target = $region49
    $region48: #{gcn_gumbel_forward.1} parent=1 // pred_region
      %316 = dma.done [#allocation5], 128
    $region49: #{gcn_gumbel_forward.1} parent=1 // pred_fallthru
      _
    %317 = vsyncpa [#allocation3], 1
    %318 = vsyncpa [#allocation5], 1

</llo_original>
